<compile_context>
chip_gen: v6e
topology: v6e:2x2x1
jax: 0.10.0
libtpu: 0.0.40
codegen_flags: <defaults>
</compile_context>

<pallas_src>
import functools

import jax
import jax.numpy as jnp
from jax.experimental import pallas as pl
from jax.experimental.pallas import tpu as pltpu


def _round_up(v, m):
    return (v + m - 1) // m * m


def _pick_batch_tile(batch, max_batch_tile):
    """Batch tile (bt) and grid steps: >=2 steps when B>=2 so both v7x TCs work."""
    if batch <= 1:
        return 1, 1
    bt = min(max_batch_tile, pl.cdiv(batch, 2))
    steps = pl.cdiv(batch, bt)
    bt = pl.cdiv(batch, steps)          # shrink tile to minimize batch padding
    return bt, steps


def _activation_dtype():
    """bf16 activations on v6e/v7x (bf16 VALU); f32 on v5e and older."""
    try:
        kind = jax.devices()[0].device_kind.lower()
    except Exception:
        return jnp.float32
    return jnp.bfloat16 if ("v6" in kind or "v7" in kind) else jnp.float32


def _sgraph_kernel(x_ref, adjT_ref, wbd_ref, b_ref, o_ref, xs_ref, *, act_dtype):
    # x_ref   : (bt, F_in, N)              input dtype (unpadded, streamed per step)
    # adjT_ref: (Np, Np)                   bf16 A^T, zero padded, grid-invariant
    # wbd_ref : (bt*F_out_p, bt*F_in_p)    bf16 block-diagonal W, grid-invariant
    # b_ref   : (F_out_p, Np)              f32 bias pre-broadcast, grid-invariant
    # o_ref   : (bt, F_out, N)             f32 output (unpadded)
    # xs_ref  : (bt, F_in_p, Np)           bf16 VMEM scratch for the padded x slab
    bt, f_in, n = x_ref.shape
    _, f_in_p, n_pad = xs_ref.shape
    f_out = o_ref.shape[1]
    f_out_p = b_ref.shape[0]

    # Zero-fill the scratch every step (it persists per-core across grid steps and
    # NaN garbage in padded rows/cols would poison the MXU even against zero
    # weights), then cast the unpadded x tile into the lane/sublane-padded slab.
    if f_in != f_in_p or n != n_pad:
        xs_ref[...] = jnp.zeros_like(xs_ref)
    xs_ref[:, 0:f_in, 0:n] = x_ref[...].astype(xs_ref.dtype)

    # static_adj: ONE MXU call for the whole batch tile (M = bt*F_in_p rows).
    h = jnp.dot(xs_ref[...].reshape(bt * f_in_p, n_pad), adjT_ref[...],
                preferred_element_type=jnp.float32)
    # LeakyReLU(0.2) as a single max (valid since 0 < slope < 1).
    h = h.astype(act_dtype)
    h = jnp.maximum(h, 0.2 * h).astype(wbd_ref.dtype)

    # static_weight: ONE block-diagonal MXU call for the whole batch tile.
    y = jnp.dot(wbd_ref[...], h, preferred_element_type=jnp.float32)
    y = y.reshape(bt, f_out_p, n_pad) + b_ref[...][None]
    y = jnp.maximum(y, 0.2 * y)
    o_ref[...] = y[:, 0:f_out, 0:n].astype(o_ref.dtype)


def sgraph_pack_params(adj_w, weight, bias, *, batch, max_batch_tile=8,
                       compute_dtype=jnp.bfloat16):
    """One-time parameter preparation (hoisted out of the per-call forward).

    adj_w : (N, N) adjacency conv weight; weight: (F_out, F_in); bias: (F_out,).
    """
    num_nodes = adj_w.shape[0]
    f_out, f_in = weight.shape
    bt, steps = _pick_batch_tile(batch, max_batch_tile)

    n_pad = _round_up(num_nodes, 128)   # lane-dense node axis
    f_in_p = _round_up(f_in, 16)        # bf16 packs 16 sublanes/vreg -> free reshapes
    f_out_p = _round_up(f_out, 16)

    adj_t = jnp.pad(adj_w.T.astype(jnp.float32),
                    ((0, n_pad - num_nodes), (0, n_pad - num_nodes))
                    ).astype(compute_dtype)
    w_p = jnp.pad(weight.astype(jnp.float32),
                  ((0, f_out_p - f_out), (0, f_in_p - f_in)))
    # Block-diagonal weight: the batch tile's second conv becomes one
    # (bt*F_out_p, bt*F_in_p) @ (bt*F_in_p, Np) matmul (fills the MXU at bt=8/F=32).
    w_bd = jnp.kron(jnp.eye(bt, dtype=jnp.float32), w_p).astype(compute_dtype)
    b_p = jnp.broadcast_to(
        jnp.pad(bias.astype(jnp.float32), (0, f_out_p - f_out))[:, None],
        (f_out_p, n_pad))

    return dict(adj_t=adj_t, w_bd=w_bd, bias=b_p,
                batch=batch, batch_tile=bt, grid_steps=steps,
                num_nodes=num_nodes, f_in=f_in, f_out=f_out,
                n_pad=n_pad, f_in_p=f_in_p, f_out_p=f_out_p,
                compute_dtype=compute_dtype)


def sgraph_forward(x, params):
    """x: (B, F_in, N) -> (B, F_out, N) float32, matching the PyTorch module."""
    batch, f_in, n = x.shape
    assert batch == params["batch"], "params were packed for a different batch size"
    assert f_in == params["f_in"] and n == params["num_nodes"]

    bt, steps = params["batch_tile"], params["grid_steps"]
    f_out, n_pad = params["f_out"], params["n_pad"]
    f_in_p, f_out_p = params["f_in_p"], params["f_out_p"]
    b_pad = bt * steps

    x_in = x if b_pad == batch else jnp.pad(x, ((0, b_pad - batch), (0, 0), (0, 0)))

    kernel = functools.partial(_sgraph_kernel, act_dtype=_activation_dtype())

    # VMEM budget (conservatively assume double-buffering everywhere) + headroom.
    vmem_bytes = (2 * bt * f_in * n * x.dtype.itemsize          # streamed x
                  + 2 * bt * f_out * n * 4                      # streamed out (f32)
                  + 2 * n_pad * n_pad * 2                       # adjT
                  + 2 * (bt * f_out_p) * (bt * f_in_p) * 2      # block-diag W
                  + 2 * f_out_p * n_pad * 4                     # bias
                  + bt * f_in_p * n_pad * 2)                    # scratch
    vmem_limit = int(min(64 << 20, max(8 << 20, 2 * vmem_bytes)))

    # Cost estimate on TRUE (unpadded) dims.
    cost = pl.CostEstimate(
        flops=2 * batch * (f_in * n * n + f_out * f_in * n),
        transcendentals=0,
        bytes_accessed=(x.size * x.dtype.itemsize + n * n * 4
                        + f_out * f_in * 4 + f_out * 4 + batch * f_out * n * 4))

    def run(single_buffer_invariants):
        extra = ({"pipeline_mode": pl.Buffered(1)}
                 if single_buffer_invariants else {})
        grid_spec = pltpu.PrefetchScalarGridSpec(
            num_scalar_prefetch=0,
            grid=(steps,),
            in_specs=[
                # x: trailing block dims == full array dims -> legal, unpadded stream.
                pl.BlockSpec((bt, f_in, n), lambda i: (i, 0, 0)),
                # grid-invariant packed parameters (single-buffered if supported).
                pl.BlockSpec((n_pad, n_pad), lambda i: (0, 0), **extra),
                pl.BlockSpec((bt * f_out_p, bt * f_in_p), lambda i: (0, 0), **extra),
                pl.BlockSpec((f_out_p, n_pad), lambda i: (0, 0), **extra),
            ],
            out_specs=pl.BlockSpec((bt, f_out, n), lambda i: (i, 0, 0)),
            scratch_shapes=[pltpu.VMEM((bt, f_in_p, n_pad), params["compute_dtype"])],
        )
        return pl.pallas_call(
            kernel,
            out_shape=jax.ShapeDtypeStruct((b_pad, f_out, n), jnp.float32),
            grid_spec=grid_spec,
            compiler_params=pltpu.CompilerParams(
                dimension_semantics=("parallel",),
                vmem_limit_bytes=vmem_limit),
            cost_estimate=cost,
        )(x_in, params["adj_t"], params["w_bd"], params["bias"])

    try:
        out = run(True)
    except Exception:
        # Older jax without BlockSpec(pipeline_mode=...) support: default buffering.
        out = run(False)

    return out if b_pad == batch else out[:batch]


def sgraph_reference(x, adj_w, weight, bias):
    """Pure-JAX (f32) reference mirroring the PyTorch forward exactly."""
    h = jnp.einsum("nm,bfm->bnf", adj_w, x)                     # static_adj conv
    h = jnp.where(h > 0, h, 0.2 * h)
    y = jnp.einsum("of,bnf->bon", weight, h) + bias[None, :, None]
    return jnp.where(y > 0, y, 0.2 * y)                         # (B, F_out, N)


if __name__ == "__main__":
    B, in_features, out_features, num_nodes = 2, 32, 32, 16

    key = jax.random.PRNGKey(0)
    k_x, k_a, k_w, k_b = jax.random.split(key, 4)

    x = jax.random.normal(k_x, (B, in_features, num_nodes), dtype=jnp.float32)
    # Synthetic parameters (shapes match Conv1d weights with kernel size 1).
    adj_w = jax.random.normal(k_a, (num_nodes, num_nodes), dtype=jnp.float32) * 0.1
    weight = jax.random.normal(k_w, (out_features, in_features), dtype=jnp.float32) * 0.1
    bias = jax.random.normal(k_b, (out_features,), dtype=jnp.float32) * 0.1

    params = sgraph_pack_params(adj_w, weight, bias, batch=B)   # one-time packing
    out = jax.block_until_ready(sgraph_forward(x, params))

    ref = sgraph_reference(x, adj_w, weight, bias)
    assert out.shape == (B, out_features, num_nodes)
    assert out.dtype == jnp.float32
    # bf16 MXU operands with f32 accumulation -> loosened tolerance vs f32 reference.
    assert jnp.allclose(out, ref, atol=2e-2, rtol=2e-2), float(jnp.max(jnp.abs(out - ref)))

    print("KERNEL_OK")
</pallas_src>

<mosaic_0001>
module attributes {stable_mosaic.version = 11 : i64} {
  func.func @_sgraph_kernel(%arg0: i32, %arg1: memref<1x32x16xf32, #tpu.memory_space<vmem>>, %arg2: memref<128x128xbf16, #tpu.memory_space<vmem>>, %arg3: memref<32x32xbf16, #tpu.memory_space<vmem>>, %arg4: memref<32x128xf32, #tpu.memory_space<vmem>>, %arg5: memref<1x32x16xf32, #tpu.memory_space<vmem>>, %arg6: memref<1x32x128xbf16, #tpu.memory_space<vmem>>) attributes {dimension_semantics = [#tpu.dimension_semantics<parallel>], iteration_bounds = array<i64: 2>, scalar_prefetch = 0 : i64, scratch_operands = 1 : i64, tpu.core_type = #tpu.core_type<tc>, window_params = [{transform_indices = @transform_0, window_bounds = array<i64: 1, 32, 16>}, {pipeline_mode = #tpu.pipeline_mode<synchronous>, transform_indices = @transform_1, window_bounds = array<i64: 128, 128>}, {pipeline_mode = #tpu.pipeline_mode<synchronous>, transform_indices = @transform_2, window_bounds = array<i64: 32, 32>}, {pipeline_mode = #tpu.pipeline_mode<synchronous>, transform_indices = @transform_3, window_bounds = array<i64: 32, 128>}, {transform_indices = @transform_4, window_bounds = array<i64: 1, 32, 16>}]} {
    %cst = arith.constant 0.000000e+00 : bf16
    %0 = vector.broadcast %cst : bf16 to vector<1x32x128xbf16>
    %c0 = arith.constant 0 : index
    %c0_0 = arith.constant 0 : index
    %c0_1 = arith.constant 0 : index
    %1 = vector.load %arg6[%c0, %c0_0, %c0_1] : memref<1x32x128xbf16, #tpu.memory_space<vmem>>, vector<1x32x128xbf16>
    tpu.vector_store %arg6[%c0, %c0_0, %c0_1], %0 {strides = array<i32>} : memref<1x32x128xbf16, #tpu.memory_space<vmem>>, vector<1x32x128xbf16>,
    %c0_2 = arith.constant 0 : index
    %c0_3 = arith.constant 0 : index
    %c0_4 = arith.constant 0 : index
    %2 = vector.load %arg1[%c0_2, %c0_3, %c0_4] : memref<1x32x16xf32, #tpu.memory_space<vmem>>, vector<1x32x16xf32>
    %3 = arith.truncf %2 : vector<1x32x16xf32> to vector<1x32x16xbf16>
    %c0_5 = arith.constant 0 : index
    %c0_6 = arith.constant 0 : index
    %c0_7 = arith.constant 0 : index
    %4 = vector.load %arg6[%c0_5, %c0_6, %c0_7] : memref<1x32x128xbf16, #tpu.memory_space<vmem>>, vector<1x32x16xbf16>
    tpu.vector_store %arg6[%c0_5, %c0_6, %c0_7], %3 {strides = array<i32>} : memref<1x32x128xbf16, #tpu.memory_space<vmem>>, vector<1x32x16xbf16>,
    %c0_8 = arith.constant 0 : index
    %c0_9 = arith.constant 0 : index
    %c0_10 = arith.constant 0 : index
    %5 = vector.load %arg6[%c0_8, %c0_9, %c0_10] : memref<1x32x128xbf16, #tpu.memory_space<vmem>>, vector<1x32x128xbf16>
    %6 = vector.shape_cast %5 : vector<1x32x128xbf16> to vector<32x128xbf16>
    %c0_11 = arith.constant 0 : index
    %c0_12 = arith.constant 0 : index
    %7 = vector.load %arg2[%c0_11, %c0_12] : memref<128x128xbf16, #tpu.memory_space<vmem>>, vector<128x128xbf16>
    %cst_13 = arith.constant dense<0.000000e+00> : vector<32x128xf32>
    %8 = tpu.matmul %6, %7, %cst_13 {dimension_numbers = #tpu.dot_dimension_numbers<[1], [0], [0], [1], [0, 0, 1, 1], [], []>} : vector<32x128xbf16>, vector<128x128xbf16>, vector<32x128xf32> -> vector<32x128xf32>
    %cst_14 = arith.constant 2.000000e-01 : f32
    %9 = vector.broadcast %cst_14 : f32 to vector<32x128xf32>
    %10 = arith.mulf %9, %8 : vector<32x128xf32>
    %11 = arith.maximumf %8, %10 : vector<32x128xf32>
    %12 = arith.truncf %11 : vector<32x128xf32> to vector<32x128xbf16>
    %c0_15 = arith.constant 0 : index
    %c0_16 = arith.constant 0 : index
    %13 = vector.load %arg3[%c0_15, %c0_16] : memref<32x32xbf16, #tpu.memory_space<vmem>>, vector<32x32xbf16>
    %cst_17 = arith.constant dense<0.000000e+00> : vector<32x128xf32>
    %14 = tpu.matmul %13, %12, %cst_17 {dimension_numbers = #tpu.dot_dimension_numbers<[1], [0], [0], [1], [0, 0, 1, 1], [], []>} : vector<32x32xbf16>, vector<32x128xbf16>, vector<32x128xf32> -> vector<32x128xf32>
    %15 = vector.shape_cast %14 : vector<32x128xf32> to vector<1x32x128xf32>
    %c0_18 = arith.constant 0 : index
    %c0_19 = arith.constant 0 : index
    %16 = vector.load %arg4[%c0_18, %c0_19] : memref<32x128xf32, #tpu.memory_space<vmem>>, vector<32x128xf32>
    %17 = vector.shape_cast %16 : vector<32x128xf32> to vector<1x32x128xf32>
    %18 = arith.addf %15, %17 : vector<1x32x128xf32>
    %cst_20 = arith.constant 2.000000e-01 : f32
    %19 = vector.broadcast %cst_20 : f32 to vector<1x32x128xf32>
    %20 = arith.mulf %19, %18 : vector<1x32x128xf32>
    %21 = arith.maximumf %18, %20 : vector<1x32x128xf32>
    %22 = vector.extract_strided_slice %21 {offsets = [0, 0, 0], sizes = [1, 32, 16], strides = [1, 1, 1]} : vector<1x32x128xf32> to vector<1x32x16xf32>
    %c0_21 = arith.constant 0 : index
    %c0_22 = arith.constant 0 : index
    %c0_23 = arith.constant 0 : index
    %23 = vector.load %arg5[%c0_21, %c0_22, %c0_23] : memref<1x32x16xf32, #tpu.memory_space<vmem>>, vector<1x32x16xf32>
    tpu.vector_store %arg5[%c0_21, %c0_22, %c0_23], %22 {strides = array<i32>} : memref<1x32x16xf32, #tpu.memory_space<vmem>>, vector<1x32x16xf32>,
    return
  }
  func.func @transform_0(%arg0: i32) -> (i32, i32, i32) {
    %c0_i32 = arith.constant 0 : i32
    %c0_i32_0 = arith.constant 0 : i32
    %c0_i32_1 = arith.constant 0 : i32
    return %arg0, %c0_i32, %c0_i32_0 : i32, i32, i32
  }
  func.func @transform_1(%arg0: i32) -> (i32, i32) {
    %c0_i32 = arith.constant 0 : i32
    %c0_i32_0 = arith.constant 0 : i32
    %c0_i32_1 = arith.constant 0 : i32
    return %c0_i32, %c0_i32_0 : i32, i32
  }
  func.func @transform_2(%arg0: i32) -> (i32, i32) {
    %c0_i32 = arith.constant 0 : i32
    %c0_i32_0 = arith.constant 0 : i32
    %c0_i32_1 = arith.constant 0 : i32
    return %c0_i32, %c0_i32_0 : i32, i32
  }
  func.func @transform_3(%arg0: i32) -> (i32, i32) {
    %c0_i32 = arith.constant 0 : i32
    %c0_i32_0 = arith.constant 0 : i32
    %c0_i32_1 = arith.constant 0 : i32
    return %c0_i32, %c0_i32_0 : i32, i32
  }
  func.func @transform_4(%arg0: i32) -> (i32, i32, i32) {
    %c0_i32 = arith.constant 0 : i32
    %c0_i32_0 = arith.constant 0 : i32
    %c0_i32_1 = arith.constant 0 : i32
    return %arg0, %c0_i32, %c0_i32_0 : i32, i32, i32
  }
}

module attributes {stable_mosaic.version = 11 : i64} {
  func.func @_sgraph_kernel(%arg0: i32, %arg1: memref<1x32x16xf32, #tpu.memory_space<vmem>>, %arg2: memref<128x128xbf16, #tpu.memory_space<vmem>>, %arg3: memref<32x32xbf16, #tpu.memory_space<vmem>>, %arg4: memref<32x128xf32, #tpu.memory_space<vmem>>, %arg5: memref<1x32x16xf32, #tpu.memory_space<vmem>>, %arg6: memref<1x32x128xbf16, #tpu.memory_space<vmem>>) attributes {dimension_semantics = [#tpu.dimension_semantics<parallel>], iteration_bounds = array<i64: 2>, scalar_prefetch = 0 : i64, scratch_operands = 1 : i64, tpu.core_type = #tpu.core_type<tc>, window_params = [{transform_indices = @transform_0, window_bounds = array<i64: 1, 32, 16>}, {pipeline_mode = #tpu.pipeline_mode<synchronous>, transform_indices = @transform_1, window_bounds = array<i64: 128, 128>}, {pipeline_mode = #tpu.pipeline_mode<synchronous>, transform_indices = @transform_2, window_bounds = array<i64: 32, 32>}, {pipeline_mode = #tpu.pipeline_mode<synchronous>, transform_indices = @transform_3, window_bounds = array<i64: 32, 128>}, {transform_indices = @transform_4, window_bounds = array<i64: 1, 32, 16>}]} {
    %cst = arith.constant 0.000000e+00 : bf16
    %0 = vector.broadcast %cst : bf16 to vector<1x32x128xbf16>
    %c0 = arith.constant 0 : index
    %c0_0 = arith.constant 0 : index
    %c0_1 = arith.constant 0 : index
    %1 = vector.load %arg6[%c0, %c0_0, %c0_1] : memref<1x32x128xbf16, #tpu.memory_space<vmem>>, vector<1x32x128xbf16>
    tpu.vector_store %arg6[%c0, %c0_0, %c0_1], %0 {strides = array<i32>} : memref<1x32x128xbf16, #tpu.memory_space<vmem>>, vector<1x32x128xbf16>,
    %c0_2 = arith.constant 0 : index
    %c0_3 = arith.constant 0 : index
    %c0_4 = arith.constant 0 : index
    %2 = vector.load %arg1[%c0_2, %c0_3, %c0_4] : memref<1x32x16xf32, #tpu.memory_space<vmem>>, vector<1x32x16xf32>
    %3 = arith.truncf %2 : vector<1x32x16xf32> to vector<1x32x16xbf16>
    %c0_5 = arith.constant 0 : index
    %c0_6 = arith.constant 0 : index
    %c0_7 = arith.constant 0 : index
    %4 = vector.load %arg6[%c0_5, %c0_6, %c0_7] : memref<1x32x128xbf16, #tpu.memory_space<vmem>>, vector<1x32x16xbf16>
    tpu.vector_store %arg6[%c0_5, %c0_6, %c0_7], %3 {strides = array<i32>} : memref<1x32x128xbf16, #tpu.memory_space<vmem>>, vector<1x32x16xbf16>,
    %c0_8 = arith.constant 0 : index
    %c0_9 = arith.constant 0 : index
    %c0_10 = arith.constant 0 : index
    %5 = vector.load %arg6[%c0_8, %c0_9, %c0_10] : memref<1x32x128xbf16, #tpu.memory_space<vmem>>, vector<1x32x128xbf16>
    %6 = vector.shape_cast %5 : vector<1x32x128xbf16> to vector<32x128xbf16>
    %c0_11 = arith.constant 0 : index
    %c0_12 = arith.constant 0 : index
    %7 = vector.load %arg2[%c0_11, %c0_12] : memref<128x128xbf16, #tpu.memory_space<vmem>>, vector<128x128xbf16>
    %cst_13 = arith.constant dense<0.000000e+00> : vector<32x128xf32>
    %8 = tpu.matmul %6, %7, %cst_13 {dimension_numbers = #tpu.dot_dimension_numbers<[1], [0], [0], [1], [0, 0, 1, 1], [], []>} : vector<32x128xbf16>, vector<128x128xbf16>, vector<32x128xf32> -> vector<32x128xf32>
    %cst_14 = arith.constant 2.000000e-01 : f32
    %9 = vector.broadcast %cst_14 : f32 to vector<32x128xf32>
    %10 = arith.mulf %9, %8 : vector<32x128xf32>
    %11 = arith.maximumf %8, %10 : vector<32x128xf32>
    %12 = arith.truncf %11 : vector<32x128xf32> to vector<32x128xbf16>
    %c0_15 = arith.constant 0 : index
    %c0_16 = arith.constant 0 : index
    %13 = vector.load %arg3[%c0_15, %c0_16] : memref<32x32xbf16, #tpu.memory_space<vmem>>, vector<32x32xbf16>
    %cst_17 = arith.constant dense<0.000000e+00> : vector<32x128xf32>
    %14 = tpu.matmul %13, %12, %cst_17 {dimension_numbers = #tpu.dot_dimension_numbers<[1], [0], [0], [1], [0, 0, 1, 1], [], []>} : vector<32x32xbf16>, vector<32x128xbf16>, vector<32x128xf32> -> vector<32x128xf32>
    %15 = vector.shape_cast %14 : vector<32x128xf32> to vector<1x32x128xf32>
    %c0_18 = arith.constant 0 : index
    %c0_19 = arith.constant 0 : index
    %16 = vector.load %arg4[%c0_18, %c0_19] : memref<32x128xf32, #tpu.memory_space<vmem>>, vector<32x128xf32>
    %17 = vector.shape_cast %16 : vector<32x128xf32> to vector<1x32x128xf32>
    %18 = arith.addf %15, %17 : vector<1x32x128xf32>
    %cst_20 = arith.constant 2.000000e-01 : f32
    %19 = vector.broadcast %cst_20 : f32 to vector<1x32x128xf32>
    %20 = arith.mulf %19, %18 : vector<1x32x128xf32>
    %21 = arith.maximumf %18, %20 : vector<1x32x128xf32>
    %22 = vector.extract_strided_slice %21 {offsets = [0, 0, 0], sizes = [1, 32, 16], strides = [1, 1, 1]} : vector<1x32x128xf32> to vector<1x32x16xf32>
    %c0_21 = arith.constant 0 : index
    %c0_22 = arith.constant 0 : index
    %c0_23 = arith.constant 0 : index
    %23 = vector.load %arg5[%c0_21, %c0_22, %c0_23] : memref<1x32x16xf32, #tpu.memory_space<vmem>>, vector<1x32x16xf32>
    tpu.vector_store %arg5[%c0_21, %c0_22, %c0_23], %22 {strides = array<i32>} : memref<1x32x16xf32, #tpu.memory_space<vmem>>, vector<1x32x16xf32>,
    return
  }
  func.func @transform_0(%arg0: i32) -> (i32, i32, i32) {
    %c0_i32 = arith.constant 0 : i32
    %c0_i32_0 = arith.constant 0 : i32
    %c0_i32_1 = arith.constant 0 : i32
    return %arg0, %c0_i32, %c0_i32_0 : i32, i32, i32
  }
  func.func @transform_1(%arg0: i32) -> (i32, i32) {
    %c0_i32 = arith.constant 0 : i32
    %c0_i32_0 = arith.constant 0 : i32
    %c0_i32_1 = arith.constant 0 : i32
    return %c0_i32, %c0_i32_0 : i32, i32
  }
  func.func @transform_2(%arg0: i32) -> (i32, i32) {
    %c0_i32 = arith.constant 0 : i32
    %c0_i32_0 = arith.constant 0 : i32
    %c0_i32_1 = arith.constant 0 : i32
    return %c0_i32, %c0_i32_0 : i32, i32
  }
  func.func @transform_3(%arg0: i32) -> (i32, i32) {
    %c0_i32 = arith.constant 0 : i32
    %c0_i32_0 = arith.constant 0 : i32
    %c0_i32_1 = arith.constant 0 : i32
    return %c0_i32, %c0_i32_0 : i32, i32
  }
  func.func @transform_4(%arg0: i32) -> (i32, i32, i32) {
    %c0_i32 = arith.constant 0 : i32
    %c0_i32_0 = arith.constant 0 : i32
    %c0_i32_1 = arith.constant 0 : i32
    return %arg0, %c0_i32, %c0_i32_0 : i32, i32, i32
  }
}

</mosaic_0001>

<llo_original>
// kernel: tpu_custom_call.1
$region0: #{tpu_custom_call.1}
  #allocation0 [shape = 'u32[]', space=smem, size = 0x4, offset = 0x4, fixed_abs, tag = 'smem constant byte address 0x4 - core index']
  #allocation1 [shape = 'u32[144,128]{1,0:T(1,128)}', space=vmem, size = 0x12000, scoped, tag = 'internal scratch']
  #allocation2 [shape = 'bf16[1,32,128]{2,1,0:T(8,128)(2,1)}', space=vmem, size = 0x2000, scoped, tag = 'scratch operand']
  %s0 = inlined_call_operand.vmem [shape: f32[2,32,16], index: 0, kind: input, shape index: {}]
  %s1 = inlined_call_operand.vmem [shape: bf16[128,128], index: 1, kind: input, shape index: {}]
  %s2 = inlined_call_operand.hbm [shape: bf16[32,32], index: 2, kind: input, shape index: {}]
  %s3 = inlined_call_operand.vmem [shape: f32[32,128], index: 3, kind: input, shape index: {}]
  %s4 = inlined_call_operand.vmem [shape: f32[2,32,16], index: 4, kind: output, shape index: {}]
  %s5 = sld [smem:[#allocation0]]
  $region53: #{tpu_custom_call.1} parent=0
    _
  %s7 = ssub.s32 1, %s5
  %s8 = scalar_select 0, %s7, %s5
  $region1: #{tpu_custom_call.1} parent=0
    #allocation3 [shape = 'u8[8192]{0}', space=vmem, size = 0x2000, scoped, tag = 'input window, operand 2, single buffered']
    #allocation4 [shape = 's32[2]{0}', space=sflag, size = 0x8, scoped, tag = 'scoped memory for tpu_custom_call.1']
    %9 = vsyncpa [#allocation4], 0
    loop: start=0, step=1, limit=4
    $region2: #{tpu_custom_call.1} parent=1 // loop_pre_header
      _
    $region3: #{tpu_custom_call.1} parent=1 // loop_header
      %s11 = sphi 0, %s15
      %p12 = scmp.ge.s32.totalorder %s11, 4
      %s21 = sphi 0, %s23
      %s24 = sphi 0, %s21
      %s25 = sphi 0, %s24
      %s41 = sphi 0, %s25
      %s45 = sphi 0, %s45
      %s47 = sphi 0, %s45
      %s48 = sphi 0, %s47
      %s62 = sphi 0, %s48
      %s66 = sphi 0, %s66
      %s68 = sphi 0, %s66
      %s69 = sphi 0, %s68
      %s83 = sphi 0, %s69
      %s87 = sphi 0, %s87
      %s89 = sphi 0, %s87
      %s90 = sphi 0, %s89
      %s104 = sphi 0, %s90
      %s110 = sphi 0, %s112
      %s113 = sphi 0, %s110
      %s114 = sphi 0, %s113
      %s130 = sphi 0, %s114
    $region4: #{tpu_custom_call.1} parent=1 // loop_header_branch
      %14 = sbr.rel (%p12) target = $region8
    $region5: #{tpu_custom_call.1} parent=1 // loop_body
      %s16 = ssub.s32 %s11, 1
      %s17 = ssub.s32 %s11, 2
      %s18 = sadd.s32 %s11, 1
      %s19 = ssub.s32 %s11, %s18
      %p20 = scmp.eq.s32.totalorder %s19, 0
      %s22 = sadd.s32 %s21, 1
      %s23 = scalar_select %p20, %s21, %s22
      %p26 = pneg %p20
      %p27 = scmp.eq.s32.totalorder %s11, 1
      %p28 = por %p26, %p27
      %p29 = scmp.ne.s32.totalorder %s21, %s24
      %p30 = scmp.eq.s32.totalorder %s11, 0
      %p31 = por %p29, %p30
      %p32 = scmp.ne.s32.totalorder %s21, %s24
      %p33 = scmp.eq.s32.totalorder %s16, 1
      %p34 = por %p32, %p33
      %p35 = scmp.ne.s32.totalorder %s24, %s25
      %p36 = scmp.eq.s32.totalorder %s16, 0
      %p37 = por %p35, %p36
      %p38 = scmp.ne.s32.totalorder %s24, %s25
      %p39 = scmp.eq.s32.totalorder %s17, 1
      %p40 = por %p38, %p39
      %p42 = scmp.ne.s32.totalorder %s25, %s41
      %p43 = scmp.eq.s32.totalorder %s17, 0
      %p44 = por %p42, %p43
      %s46 = sadd.s32 %s45, 1
      %p49 = scmp.eq.s32.totalorder %s11, 1
      %p50 = scmp.ne.s32.totalorder %s45, %s47
      %p51 = scmp.eq.s32.totalorder %s11, 0
      %p52 = por %p50, %p51
      %p53 = scmp.ne.s32.totalorder %s45, %s47
      %p54 = scmp.eq.s32.totalorder %s16, 1
      %p55 = por %p53, %p54
      %p56 = scmp.ne.s32.totalorder %s47, %s48
      %p57 = scmp.eq.s32.totalorder %s16, 0
      %p58 = por %p56, %p57
      %p59 = scmp.ne.s32.totalorder %s47, %s48
      %p60 = scmp.eq.s32.totalorder %s17, 1
      %p61 = por %p59, %p60
      %p63 = scmp.ne.s32.totalorder %s48, %s62
      %p64 = scmp.eq.s32.totalorder %s17, 0
      %p65 = por %p63, %p64
      %s67 = sadd.s32 %s66, 1
      %p70 = scmp.eq.s32.totalorder %s11, 1
      %p71 = scmp.ne.s32.totalorder %s66, %s68
      %p72 = scmp.eq.s32.totalorder %s11, 0
      %p73 = por %p71, %p72
      %p74 = scmp.ne.s32.totalorder %s66, %s68
      %p75 = scmp.eq.s32.totalorder %s16, 1
      %p76 = por %p74, %p75
      %p77 = scmp.ne.s32.totalorder %s68, %s69
      %p78 = scmp.eq.s32.totalorder %s16, 0
      %p79 = por %p77, %p78
      %p80 = scmp.ne.s32.totalorder %s68, %s69
      %p81 = scmp.eq.s32.totalorder %s17, 1
      %p82 = por %p80, %p81
      %p84 = scmp.ne.s32.totalorder %s69, %s83
      %p85 = scmp.eq.s32.totalorder %s17, 0
      %p86 = por %p84, %p85
      %s88 = sadd.s32 %s87, 1
      %p91 = scmp.eq.s32.totalorder %s11, 1
      %p92 = scmp.ne.s32.totalorder %s87, %s89
      %p93 = scmp.eq.s32.totalorder %s11, 0
      %p94 = por %p92, %p93
      %p95 = scmp.ne.s32.totalorder %s87, %s89
      %p96 = scmp.eq.s32.totalorder %s16, 1
      %p97 = por %p95, %p96
      %p98 = scmp.ne.s32.totalorder %s89, %s90
      %p99 = scmp.eq.s32.totalorder %s16, 0
      %p100 = por %p98, %p99
      %p101 = scmp.ne.s32.totalorder %s89, %s90
      %p102 = scmp.eq.s32.totalorder %s17, 1
      %p103 = por %p101, %p102
      %p105 = scmp.ne.s32.totalorder %s90, %s104
      %p106 = scmp.eq.s32.totalorder %s17, 0
      %p107 = por %p105, %p106
      %s108 = ssub.s32 %s11, %s18
      %p109 = scmp.eq.s32.totalorder %s108, 0
      %s111 = sadd.s32 %s110, 1
      %s112 = scalar_select %p109, %s110, %s111
      %p115 = pneg %p109
      %p116 = scmp.eq.s32.totalorder %s11, 1
      %p117 = por %p115, %p116
      %p118 = scmp.ne.s32.totalorder %s110, %s113
      %p119 = scmp.eq.s32.totalorder %s11, 0
      %p120 = por %p118, %p119
      %p121 = scmp.ne.s32.totalorder %s110, %s113
      %p122 = scmp.eq.s32.totalorder %s16, 1
      %p123 = por %p121, %p122
      %p124 = scmp.ne.s32.totalorder %s113, %s114
      %p125 = scmp.eq.s32.totalorder %s16, 0
      %p126 = por %p124, %p125
      %p127 = scmp.ne.s32.totalorder %s113, %s114
      %p128 = scmp.eq.s32.totalorder %s17, 1
      %p129 = por %p127, %p128
      %p131 = scmp.ne.s32.totalorder %s114, %s130
      %p132 = scmp.eq.s32.totalorder %s17, 0
      %p133 = por %p131, %p132
      %p134 = scmp.le.s32.totalorder 1, %s11
      %p135 = scmp.lt.s32.totalorder %s11, 3
      %p136 = pnand %p134, %p135
      %p137 = pneg %p136
      // Predicated region
      $region9: #{tpu_custom_call.1} parent=5 // pred_check
        _
      $region10: #{tpu_custom_call.1} parent=5 // pred_check_branch
        %139 = sbr.rel (%p136) target = $region12
      $region11: #{tpu_custom_call.1} parent=5 // pred_region
        %s140 = ssub.s32 %s11, 1
        // Predicated region
        $region13: #{tpu_custom_call.1} parent=11 // pred_check
          %p141 = pneg %p58
        $region14: #{tpu_custom_call.1} parent=11 // pred_check_branch
          %143 = sbr.rel (%p141) target = $region16
        $region15: #{tpu_custom_call.1} parent=11 // pred_region
          _
        $region16: #{tpu_custom_call.1} parent=11 // pred_fallthru
          _
        // Predicated region
        $region17: #{tpu_custom_call.1} parent=11 // pred_check
          %p144 = pneg %p79
        $region18: #{tpu_custom_call.1} parent=11 // pred_check_branch
          %146 = sbr.rel (%p144) target = $region20
        $region19: #{tpu_custom_call.1} parent=11 // pred_region
          %s148 = ssub.s32 256, 256
          %149 = vsyncadd [#allocation4], %s148
          %s150 = sshll.u32 [#allocation3], 4
          %s151 = int_to_ptr.vmem [resolvable:$true] %s150
          %156 = dma.hbm_to_vmem [thread:$0]  %s2, 256, %s151, [#allocation4], 64, 64, 4
        $region20: #{tpu_custom_call.1} parent=11 // pred_fallthru
          _
        // Predicated region
        $region21: #{tpu_custom_call.1} parent=11 // pred_check
          %p157 = pneg %p100
        $region22: #{tpu_custom_call.1} parent=11 // pred_check_branch
          %159 = sbr.rel (%p157) target = $region24
        $region23: #{tpu_custom_call.1} parent=11 // pred_region
          _
        $region24: #{tpu_custom_call.1} parent=11 // pred_fallthru
          _
      $region12: #{tpu_custom_call.1} parent=5 // pred_fallthru
        _
      %p160 = scmp.lt.s32.totalorder %s11, 2
      // Predicated region
      $region25: #{tpu_custom_call.1} parent=5 // pred_check
        %p161 = pneg %p160
      $region26: #{tpu_custom_call.1} parent=5 // pred_check_branch
        %163 = sbr.rel (%p161) target = $region28
      $region27: #{tpu_custom_call.1} parent=5 // pred_region
        // Predicated region
        $region29: #{tpu_custom_call.1} parent=27 // pred_check
          %p164 = pneg %p31
        $region30: #{tpu_custom_call.1} parent=27 // pred_check_branch
          %166 = sbr.rel (%p164) target = $region32
        $region31: #{tpu_custom_call.1} parent=27 // pred_region
          %p167 = scmp.lt.s32.totalorder %s11, 1
          %s168 = scalar_select %p167, %s11, 1
          %s169 = smul.addr %s168, 4
          %s170 = smul.addr %s169, 8
          %s171 = scalar_lea.vmem %s0, %s170
        $region32: #{tpu_custom_call.1} parent=27 // pred_fallthru
          _
      $region28: #{tpu_custom_call.1} parent=5 // pred_fallthru
        _
      %p172 = scmp.le.s32.totalorder 1, %s11
      %p173 = scmp.lt.s32.totalorder %s11, 3
      %p174 = pnand %p172, %p173
      %p175 = pneg %p174
      // Predicated region
      $region33: #{tpu_custom_call.1} parent=5 // pred_check
        _
      $region34: #{tpu_custom_call.1} parent=5 // pred_check_branch
        %177 = sbr.rel (%p174) target = $region36
      $region35: #{tpu_custom_call.1} parent=5 // pred_region
        %s178 = ssub.s32 %s11, 1
        // Predicated region
        $region37: #{tpu_custom_call.1} parent=35 // pred_check
          %p179 = pneg %p79
        $region38: #{tpu_custom_call.1} parent=35 // pred_check_branch
          %181 = sbr.rel (%p179) target = $region40
        $region39: #{tpu_custom_call.1} parent=35 // pred_region
          %182 = dma.done [#allocation4], 256
        $region40: #{tpu_custom_call.1} parent=35 // pred_fallthru
          _
        %p183 = scmp.lt.s32.totalorder %s16, 1
        %s184 = scalar_select %p183, %s16, 1
        %s185 = smul.addr %s184, 4
        %s186 = smul.addr %s185, 8
        %s187 = scalar_lea.vmem %s0, %s186
        %p188 = pneg %p37
        %p189 = pneg %p34
        %p190 = pneg %p58
        %p191 = pneg %p55
        %p192 = pneg %p79
        %p193 = pneg %p76
        %p194 = pneg %p100
        %p195 = pneg %p97
        %p196 = pneg %p126
        %p197 = pneg %p123
        %p198 = scmp.lt.s32.totalorder %s16, 1
        %s199 = scalar_select %p198, %s16, 1
        %s200 = smul.addr %s199, 4
        %s201 = smul.addr %s200, 8
        %s202 = scalar_lea.vmem %s4, %s201
        %p203 = scmp.lt.s32.totalorder %s16, 1
        %s204 = scalar_select %p203, %s16, 1
        %s205 = smul.addr %s204, 4
        %s206 = smul.addr %s205, 8
        %s207 = scalar_lea.vmem %s0, %s206
        %p208 = scmp.lt.s32.totalorder %s16, 1
        %s209 = scalar_select %p208, %s16, 1
        %s210 = smul.addr %s209, 4
        %s211 = smul.addr %s210, 8
        %s212 = scalar_lea.vmem %s4, %s211
        %214 = vst [vmem:[#allocation2] sm:$0xf] 0
        %215 = vst [vmem:[#allocation2 + $0x4] sm:$0xf] 0
        %216 = vst [vmem:[#allocation2 + $0x8] sm:$0xf] 0
        %217 = vst [vmem:[#allocation2 + $0xc] sm:$0xf] 0
        %v218 = vld [vmem:[%s207] sm:$0xff]
        %v219 = vld [vmem:[%s207 + $0x8] sm:$0xff]
        %v220 = vld [vmem:[%s207 + $0x10] sm:$0xff]
        %v221 = vld [vmem:[%s207 + $0x18] sm:$0xff]
        %v222 = vpack.c.bf16 %v219, %v218
        %v223 = vpack.c.bf16 %v221, %v220
        %v226 = vunpack.c.l.b16 %v222
        %v227 = vunpack.c.h.b16 %v222
        %v228 = vunpack.c.l.b16 %v223
        %v229 = vunpack.c.h.b16 %v223
        %v230 = vpack.c.b16 %v226, %v226
        %v231 = vpack.c.b16 %v227, %v227
        %v232 = vpack.c.b16 %v228, %v228
        %v233 = vpack.c.b16 %v229, %v229
        %vm238 = vcmask 125952
        %239 = vst.msk [vmem:[#allocation2] sm:$0xf] %vm238, %v230
        %240 = vst.msk [vmem:[#allocation2 + $0x4] sm:$0xf] %vm238, %v231
        %241 = vst.msk [vmem:[#allocation2 + $0x8] sm:$0xf] %vm238, %v232
        %242 = vst.msk [vmem:[#allocation2 + $0xc] sm:$0xf] %vm238, %v233
        %v243 = vld [vmem:[#allocation2] sm:$0xf]
        %v244 = vld [vmem:[#allocation2 + $0x4] sm:$0xf]
        %v245 = vld [vmem:[#allocation2 + $0x8] sm:$0xf]
        %v246 = vld [vmem:[#allocation2 + $0xc] sm:$0xf]
        %v247 = vld [vmem:[%s1] sm:$0xf]
        %v248 = vld [vmem:[%s1 + $0x4] sm:$0xf]
        %v249 = vld [vmem:[%s1 + $0x8] sm:$0xf]
        %v250 = vld [vmem:[%s1 + $0xc] sm:$0xf]
        %v251 = vld [vmem:[%s1 + $0x10] sm:$0xf]
        %v252 = vld [vmem:[%s1 + $0x14] sm:$0xf]
        %v253 = vld [vmem:[%s1 + $0x18] sm:$0xf]
        %v254 = vld [vmem:[%s1 + $0x1c] sm:$0xf]
        %v255 = vld [vmem:[%s1 + $0x20] sm:$0xf]
        %v256 = vld [vmem:[%s1 + $0x24] sm:$0xf]
        %v257 = vld [vmem:[%s1 + $0x28] sm:$0xf]
        %v258 = vld [vmem:[%s1 + $0x2c] sm:$0xf]
        %v259 = vld [vmem:[%s1 + $0x30] sm:$0xf]
        %v260 = vld [vmem:[%s1 + $0x34] sm:$0xf]
        %v261 = vld [vmem:[%s1 + $0x38] sm:$0xf]
        %v262 = vld [vmem:[%s1 + $0x3c] sm:$0xf]
        %v267 = vunpack.c.l.b16 %v243
        %v268 = vunpack.c.l.b16 %v244
        %v269 = vunpack.c.l.b16 %v245
        %v270 = vunpack.c.l.b16 %v246
        %v271 = vpack.c.b16 %v268, %v267
        %v272 = vpack.c.b16 %v270, %v269
        %v291 = vunpack.c.l.b16 %v247
        %v292 = vunpack.c.l.b16 %v248
        %v293 = vunpack.c.l.b16 %v249
        %v294 = vunpack.c.l.b16 %v250
        %v295 = vunpack.c.l.b16 %v251
        %v296 = vunpack.c.l.b16 %v252
        %v297 = vunpack.c.l.b16 %v253
        %v298 = vunpack.c.l.b16 %v254
        %v299 = vunpack.c.l.b16 %v255
        %v300 = vunpack.c.l.b16 %v256
        %v301 = vunpack.c.l.b16 %v257
        %v302 = vunpack.c.l.b16 %v258
        %v303 = vunpack.c.l.b16 %v259
        %v304 = vunpack.c.l.b16 %v260
        %v305 = vunpack.c.l.b16 %v261
        %v306 = vunpack.c.l.b16 %v262
        %v307 = vpack.c.b16 %v292, %v291
        %v308 = vpack.c.b16 %v294, %v293
        %v309 = vpack.c.b16 %v296, %v295
        %v310 = vpack.c.b16 %v298, %v297
        %v311 = vpack.c.b16 %v300, %v299
        %v312 = vpack.c.b16 %v302, %v301
        %v313 = vpack.c.b16 %v304, %v303
        %v314 = vpack.c.b16 %v306, %v305
        %323 = vmatprep.subr.bf16.mxu0 0
        %324 = vmatpush1.bf16.msra.mxu0 %v314
        %325 = vmatprep.subr.bf16.mxu0 0
        %326 = vmatpush1.bf16.msra.mxu0 %v313
        %327 = vmatprep.subr.bf16.mxu0 0
        %328 = vmatpush1.bf16.msra.mxu0 %v312
        %329 = vmatprep.subr.bf16.mxu0 0
        %330 = vmatpush1.bf16.msra.mxu0 %v311
        %331 = vmatprep.subr.bf16.mxu0 0
        %332 = vmatpush1.bf16.msra.mxu0 %v310
        %333 = vmatprep.subr.bf16.mxu0 0
        %334 = vmatpush1.bf16.msra.mxu0 %v309
        %335 = vmatprep.subr.bf16.mxu0 0
        %336 = vmatpush1.bf16.msra.mxu0 %v308
        %337 = vmatprep.subr.bf16.mxu0 0
        %338 = vmatpush1.bf16.msra.mxu0 %v307
        %339 = vmatprep.subr.bf16.mxu0 0
        %340 = vmatpush2.bf16.msra.mxu0 0
        %341 = vmatprep.subr.bf16.mxu0 0
        %342 = vmatpush2.bf16.msra.mxu0 0
        %343 = vmatprep.subr.bf16.mxu0 0
        %344 = vmatpush2.bf16.msra.mxu0 0
        %345 = vmatprep.subr.bf16.mxu0 0
        %346 = vmatpush2.bf16.msra.mxu0 0
        %347 = vmatprep.subr.bf16.mxu0 0
        %348 = vmatpush2.bf16.msra.mxu0 0
        %349 = vmatprep.subr.bf16.mxu0 0
        %350 = vmatpush2.bf16.msra.mxu0 0
        %351 = vmatprep.subr.bf16.mxu0 0
        %352 = vmatpush2.bf16.msra.mxu0 0
        %353 = vmatprep.subr.bf16.mxu0 0
        %354 = vmatpush2.bf16.msra.mxu0 0
        %355 = vmatprep.mubr.bf16.mxu0 0
        %356 = vmatmul.mubr.bf16.gmra.mxu0 %v271
        %v357 = vpop.f32.mrf.mxu0
        %v358 = vadd.f32 0.0, %v357
        %v359 = vpop.f32.mrf.mxu0
        %v360 = vpop.f32.mrf.mxu0
        %v361 = vadd.f32 0.0, %v360
        %v362 = vpop.f32.mrf.mxu0
        %363 = vmatprep.mubr.bf16.mxu0 0
        %364 = vmatmul.mubr.bf16.gmra.mxu0 %v272
        %v365 = vpop.f32.mrf.mxu0
        %v366 = vadd.f32 0.0, %v365
        %v367 = vpop.f32.mrf.mxu0
        %v368 = vpop.f32.mrf.mxu0
        %v369 = vadd.f32 0.0, %v368
        %v370 = vpop.f32.mrf.mxu0
        %371 = vdwg.mxu0
        %v372 = vmul.f32 %v358, 0.2
        %v373 = vmul.f32 %v361, 0.2
        %v374 = vmul.f32 %v366, 0.2
        %v375 = vmul.f32 %v369, 0.2
        %v376 = vmax.f32 %v358, %v372
        %v377 = vmax.f32 %v361, %v373
        %v378 = vmax.f32 %v366, %v374
        %v379 = vmax.f32 %v369, %v375
        %v380 = vpack.c.bf16 %v377, %v376
        %v381 = vpack.c.bf16 %v379, %v378
        %v382 = vld [vmem:[#allocation3] sm:$0xf]
        %v383 = vld [vmem:[#allocation3 + $0x4] sm:$0xf]
        %v384 = vld [vmem:[#allocation3 + $0x8] sm:$0xf]
        %v385 = vld [vmem:[#allocation3 + $0xc] sm:$0xf]
        %v390 = vunpack.c.l.b16 %v382
        %v391 = vunpack.c.l.b16 %v383
        %v392 = vunpack.c.l.b16 %v384
        %v393 = vunpack.c.l.b16 %v385
        %v394 = vpack.c.b16 %v391, %v390
        %v395 = vpack.c.b16 %v393, %v392
        %vm396 = vcmask 261120
        %v398 = vsel %vm396, %v394, 0
        %v401 = vsel %vm396, %v395, 0
        %403 = vmatprep.subr.bf16.mxu0 0
        %404 = vmatpush1.bf16.msra.mxu0 0
        %405 = vmatprep.subr.bf16.mxu0 0
        %406 = vmatpush1.bf16.msra.mxu0 0
        %407 = vmatprep.subr.bf16.mxu0 0
        %408 = vmatpush1.bf16.msra.mxu0 0
        %409 = vmatprep.subr.bf16.mxu0 0
        %410 = vmatpush1.bf16.msra.mxu0 0
        %411 = vmatprep.subr.bf16.mxu0 0
        %412 = vmatpush1.bf16.msra.mxu0 0
        %413 = vmatprep.subr.bf16.mxu0 0
        %414 = vmatpush1.bf16.msra.mxu0 0
        %415 = vmatprep.subr.bf16.mxu0 0
        %416 = vmatpush1.bf16.msra.mxu0 %v381
        %417 = vmatprep.subr.bf16.mxu0 0
        %418 = vmatpush1.bf16.msra.mxu0 %v380
        %419 = vmatprep.subr.bf16.mxu0 0
        %420 = vmatpush2.bf16.msra.mxu0 0
        %421 = vmatprep.subr.bf16.mxu0 0
        %422 = vmatpush2.bf16.msra.mxu0 0
        %423 = vmatprep.subr.bf16.mxu0 0
        %424 = vmatpush2.bf16.msra.mxu0 0
        %425 = vmatprep.subr.bf16.mxu0 0
        %426 = vmatpush2.bf16.msra.mxu0 0
        %427 = vmatprep.subr.bf16.mxu0 0
        %428 = vmatpush2.bf16.msra.mxu0 0
        %429 = vmatprep.subr.bf16.mxu0 0
        %430 = vmatpush2.bf16.msra.mxu0 0
        %431 = vmatprep.subr.bf16.mxu0 0
        %432 = vmatpush2.bf16.msra.mxu0 0
        %433 = vmatprep.subr.bf16.mxu0 0
        %434 = vmatpush2.bf16.msra.mxu0 0
        %435 = vmatprep.mubr.bf16.mxu0 0
        %436 = vmatmul.mubr.bf16.gmra.mxu0 %v398
        %v437 = vpop.f32.mrf.mxu0
        %v438 = vadd.f32 0.0, %v437
        %v439 = vpop.f32.mrf.mxu0
        %v440 = vpop.f32.mrf.mxu0
        %v441 = vadd.f32 0.0, %v440
        %v442 = vpop.f32.mrf.mxu0
        %443 = vmatprep.mubr.bf16.mxu0 0
        %444 = vmatmul.mubr.bf16.gmra.mxu0 %v401
        %v445 = vpop.f32.mrf.mxu0
        %v446 = vadd.f32 0.0, %v445
        %v447 = vpop.f32.mrf.mxu0
        %v448 = vpop.f32.mrf.mxu0
        %v449 = vadd.f32 0.0, %v448
        %v450 = vpop.f32.mrf.mxu0
        %451 = vdwg.mxu0
        %v452 = vld [vmem:[%s3] sm:$0xff]
        %v453 = vld [vmem:[%s3 + $0x8] sm:$0xff]
        %v454 = vld [vmem:[%s3 + $0x10] sm:$0xff]
        %v455 = vld [vmem:[%s3 + $0x18] sm:$0xff]
        %v456 = vadd.f32 %v438, %v452
        %v457 = vadd.f32 %v441, %v453
        %v458 = vadd.f32 %v446, %v454
        %v459 = vadd.f32 %v449, %v455
        %v460 = vmul.f32 %v456, 0.2
        %v461 = vmul.f32 %v457, 0.2
        %v462 = vmul.f32 %v458, 0.2
        %v463 = vmul.f32 %v459, 0.2
        %v464 = vmax.f32 %v456, %v460
        %v465 = vmax.f32 %v457, %v461
        %v466 = vmax.f32 %v458, %v462
        %v467 = vmax.f32 %v459, %v463
        %vm468 = vcmask 130048
        %469 = vst.msk [vmem:[%s212] sm:$0xff] %vm468, %v464
        %470 = vst.msk [vmem:[%s212 + $0x8] sm:$0xff] %vm468, %v465
        %471 = vst.msk [vmem:[%s212 + $0x10] sm:$0xff] %vm468, %v466
        %472 = vst.msk [vmem:[%s212 + $0x18] sm:$0xff] %vm468, %v467
        %p473 = scmp.lt.s32.totalorder %s16, 1
        %s474 = scalar_select %p473, %s16, 1
        %s475 = smul.addr %s474, 4
        %s476 = smul.addr %s475, 8
        %s477 = scalar_lea.vmem %s4, %s476
        // Predicated region
        $region41: #{tpu_custom_call.1} parent=35 // pred_check
          %p478 = pneg %p123
        $region42: #{tpu_custom_call.1} parent=35 // pred_check_branch
          %480 = sbr.rel (%p478) target = $region44
        $region43: #{tpu_custom_call.1} parent=35 // pred_region
          _
        $region44: #{tpu_custom_call.1} parent=35 // pred_fallthru
          _
      $region36: #{tpu_custom_call.1} parent=5 // pred_fallthru
        _
      %p481 = scmp.le.s32.totalorder 2, %s11
      // Predicated region
      $region45: #{tpu_custom_call.1} parent=5 // pred_check
        %p482 = pneg %p481
      $region46: #{tpu_custom_call.1} parent=5 // pred_check_branch
        %484 = sbr.rel (%p482) target = $region48
      $region47: #{tpu_custom_call.1} parent=5 // pred_region
        %s485 = ssub.s32 %s11, 2
        // Predicated region
        $region49: #{tpu_custom_call.1} parent=47 // pred_check
          %p486 = pneg %p129
        $region50: #{tpu_custom_call.1} parent=47 // pred_check_branch
          %488 = sbr.rel (%p486) target = $region52
        $region51: #{tpu_custom_call.1} parent=47 // pred_region
          %p489 = scmp.lt.s32.totalorder %s17, 1
          %s490 = scalar_select %p489, %s17, 1
          %s491 = smul.addr %s490, 4
          %s492 = smul.addr %s491, 8
          %s493 = scalar_lea.vmem %s4, %s492
        $region52: #{tpu_custom_call.1} parent=47 // pred_fallthru
          _
      $region48: #{tpu_custom_call.1} parent=5 // pred_fallthru
        _
    $region6: #{tpu_custom_call.1} parent=1 // loop_footer
      %s15 = sadd.s32 1, %s11
    $region7: #{tpu_custom_call.1} parent=1 // loop_footer_branch
      %10 = sbr.rel target = $region3
    $region8: #{tpu_custom_call.1} parent=1 // loop_exit
      _
    %494 = vsyncpa [#allocation4], 1
    %s495 = scalar_lea.sflag [#allocation4], 1
    %496 = vsyncpa %s495, 1

// kernel: tpu_custom_call.1
$region0: #{tpu_custom_call.1}
  #allocation0 [shape = 'u32[]', space=smem, size = 0x4, offset = 0x4, fixed_abs, tag = 'smem constant byte address 0x4 - core index']
  #allocation1 [shape = 'u32[144,128]{1,0:T(1,128)}', space=vmem, size = 0x12000, scoped, tag = 'internal scratch']
  #allocation2 [shape = 'bf16[1,32,128]{2,1,0:T(8,128)(2,1)}', space=vmem, size = 0x2000, scoped, tag = 'scratch operand']
  %s0 = inlined_call_operand.vmem [shape: f32[2,32,16], index: 0, kind: input, shape index: {}]
  %s1 = inlined_call_operand.vmem [shape: bf16[128,128], index: 1, kind: input, shape index: {}]
  %s2 = inlined_call_operand.hbm [shape: bf16[32,32], index: 2, kind: input, shape index: {}]
  %s3 = inlined_call_operand.vmem [shape: f32[32,128], index: 3, kind: input, shape index: {}]
  %s4 = inlined_call_operand.vmem [shape: f32[2,32,16], index: 4, kind: output, shape index: {}]
  %s5 = sld [smem:[#allocation0]]
  $region53: #{tpu_custom_call.1} parent=0
    _
  %s7 = ssub.s32 1, %s5
  %s8 = scalar_select 0, %s7, %s5
  $region1: #{tpu_custom_call.1} parent=0
    #allocation3 [shape = 'u8[8192]{0}', space=vmem, size = 0x2000, scoped, tag = 'input window, operand 2, single buffered']
    #allocation4 [shape = 's32[2]{0}', space=sflag, size = 0x8, scoped, tag = 'scoped memory for tpu_custom_call.1']
    %9 = vsyncpa [#allocation4], 0
    loop: start=0, step=1, limit=4
    $region2: #{tpu_custom_call.1} parent=1 // loop_pre_header
      _
    $region3: #{tpu_custom_call.1} parent=1 // loop_header
      %s11 = sphi 0, %s15
      %p12 = scmp.ge.s32.totalorder %s11, 4
      %s21 = sphi 0, %s23
      %s24 = sphi 0, %s21
      %s25 = sphi 0, %s24
      %s41 = sphi 0, %s25
      %s45 = sphi 0, %s45
      %s47 = sphi 0, %s45
      %s48 = sphi 0, %s47
      %s62 = sphi 0, %s48
      %s66 = sphi 0, %s66
      %s68 = sphi 0, %s66
      %s69 = sphi 0, %s68
      %s83 = sphi 0, %s69
      %s87 = sphi 0, %s87
      %s89 = sphi 0, %s87
      %s90 = sphi 0, %s89
      %s104 = sphi 0, %s90
      %s110 = sphi 0, %s112
      %s113 = sphi 0, %s110
      %s114 = sphi 0, %s113
      %s130 = sphi 0, %s114
    $region4: #{tpu_custom_call.1} parent=1 // loop_header_branch
      %14 = sbr.rel (%p12) target = $region8
    $region5: #{tpu_custom_call.1} parent=1 // loop_body
      %s16 = ssub.s32 %s11, 1
      %s17 = ssub.s32 %s11, 2
      %s18 = sadd.s32 %s11, 1
      %s19 = ssub.s32 %s11, %s18
      %p20 = scmp.eq.s32.totalorder %s19, 0
      %s22 = sadd.s32 %s21, 1
      %s23 = scalar_select %p20, %s21, %s22
      %p26 = pneg %p20
      %p27 = scmp.eq.s32.totalorder %s11, 1
      %p28 = por %p26, %p27
      %p29 = scmp.ne.s32.totalorder %s21, %s24
      %p30 = scmp.eq.s32.totalorder %s11, 0
      %p31 = por %p29, %p30
      %p32 = scmp.ne.s32.totalorder %s21, %s24
      %p33 = scmp.eq.s32.totalorder %s16, 1
      %p34 = por %p32, %p33
      %p35 = scmp.ne.s32.totalorder %s24, %s25
      %p36 = scmp.eq.s32.totalorder %s16, 0
      %p37 = por %p35, %p36
      %p38 = scmp.ne.s32.totalorder %s24, %s25
      %p39 = scmp.eq.s32.totalorder %s17, 1
      %p40 = por %p38, %p39
      %p42 = scmp.ne.s32.totalorder %s25, %s41
      %p43 = scmp.eq.s32.totalorder %s17, 0
      %p44 = por %p42, %p43
      %s46 = sadd.s32 %s45, 1
      %p49 = scmp.eq.s32.totalorder %s11, 1
      %p50 = scmp.ne.s32.totalorder %s45, %s47
      %p51 = scmp.eq.s32.totalorder %s11, 0
      %p52 = por %p50, %p51
      %p53 = scmp.ne.s32.totalorder %s45, %s47
      %p54 = scmp.eq.s32.totalorder %s16, 1
      %p55 = por %p53, %p54
      %p56 = scmp.ne.s32.totalorder %s47, %s48
      %p57 = scmp.eq.s32.totalorder %s16, 0
      %p58 = por %p56, %p57
      %p59 = scmp.ne.s32.totalorder %s47, %s48
      %p60 = scmp.eq.s32.totalorder %s17, 1
      %p61 = por %p59, %p60
      %p63 = scmp.ne.s32.totalorder %s48, %s62
      %p64 = scmp.eq.s32.totalorder %s17, 0
      %p65 = por %p63, %p64
      %s67 = sadd.s32 %s66, 1
      %p70 = scmp.eq.s32.totalorder %s11, 1
      %p71 = scmp.ne.s32.totalorder %s66, %s68
      %p72 = scmp.eq.s32.totalorder %s11, 0
      %p73 = por %p71, %p72
      %p74 = scmp.ne.s32.totalorder %s66, %s68
      %p75 = scmp.eq.s32.totalorder %s16, 1
      %p76 = por %p74, %p75
      %p77 = scmp.ne.s32.totalorder %s68, %s69
      %p78 = scmp.eq.s32.totalorder %s16, 0
      %p79 = por %p77, %p78
      %p80 = scmp.ne.s32.totalorder %s68, %s69
      %p81 = scmp.eq.s32.totalorder %s17, 1
      %p82 = por %p80, %p81
      %p84 = scmp.ne.s32.totalorder %s69, %s83
      %p85 = scmp.eq.s32.totalorder %s17, 0
      %p86 = por %p84, %p85
      %s88 = sadd.s32 %s87, 1
      %p91 = scmp.eq.s32.totalorder %s11, 1
      %p92 = scmp.ne.s32.totalorder %s87, %s89
      %p93 = scmp.eq.s32.totalorder %s11, 0
      %p94 = por %p92, %p93
      %p95 = scmp.ne.s32.totalorder %s87, %s89
      %p96 = scmp.eq.s32.totalorder %s16, 1
      %p97 = por %p95, %p96
      %p98 = scmp.ne.s32.totalorder %s89, %s90
      %p99 = scmp.eq.s32.totalorder %s16, 0
      %p100 = por %p98, %p99
      %p101 = scmp.ne.s32.totalorder %s89, %s90
      %p102 = scmp.eq.s32.totalorder %s17, 1
      %p103 = por %p101, %p102
      %p105 = scmp.ne.s32.totalorder %s90, %s104
      %p106 = scmp.eq.s32.totalorder %s17, 0
      %p107 = por %p105, %p106
      %s108 = ssub.s32 %s11, %s18
      %p109 = scmp.eq.s32.totalorder %s108, 0
      %s111 = sadd.s32 %s110, 1
      %s112 = scalar_select %p109, %s110, %s111
      %p115 = pneg %p109
      %p116 = scmp.eq.s32.totalorder %s11, 1
      %p117 = por %p115, %p116
      %p118 = scmp.ne.s32.totalorder %s110, %s113
      %p119 = scmp.eq.s32.totalorder %s11, 0
      %p120 = por %p118, %p119
      %p121 = scmp.ne.s32.totalorder %s110, %s113
      %p122 = scmp.eq.s32.totalorder %s16, 1
      %p123 = por %p121, %p122
      %p124 = scmp.ne.s32.totalorder %s113, %s114
      %p125 = scmp.eq.s32.totalorder %s16, 0
      %p126 = por %p124, %p125
      %p127 = scmp.ne.s32.totalorder %s113, %s114
      %p128 = scmp.eq.s32.totalorder %s17, 1
      %p129 = por %p127, %p128
      %p131 = scmp.ne.s32.totalorder %s114, %s130
      %p132 = scmp.eq.s32.totalorder %s17, 0
      %p133 = por %p131, %p132
      %p134 = scmp.le.s32.totalorder 1, %s11
      %p135 = scmp.lt.s32.totalorder %s11, 3
      %p136 = pnand %p134, %p135
      %p137 = pneg %p136
      // Predicated region
      $region9: #{tpu_custom_call.1} parent=5 // pred_check
        _
      $region10: #{tpu_custom_call.1} parent=5 // pred_check_branch
        %139 = sbr.rel (%p136) target = $region12
      $region11: #{tpu_custom_call.1} parent=5 // pred_region
        %s140 = ssub.s32 %s11, 1
        // Predicated region
        $region13: #{tpu_custom_call.1} parent=11 // pred_check
          %p141 = pneg %p58
        $region14: #{tpu_custom_call.1} parent=11 // pred_check_branch
          %143 = sbr.rel (%p141) target = $region16
        $region15: #{tpu_custom_call.1} parent=11 // pred_region
          _
        $region16: #{tpu_custom_call.1} parent=11 // pred_fallthru
          _
        // Predicated region
        $region17: #{tpu_custom_call.1} parent=11 // pred_check
          %p144 = pneg %p79
        $region18: #{tpu_custom_call.1} parent=11 // pred_check_branch
          %146 = sbr.rel (%p144) target = $region20
        $region19: #{tpu_custom_call.1} parent=11 // pred_region
          %s148 = ssub.s32 256, 256
          %149 = vsyncadd [#allocation4], %s148
          %s150 = sshll.u32 [#allocation3], 4
          %s151 = int_to_ptr.vmem [resolvable:$true] %s150
          %156 = dma.hbm_to_vmem [thread:$0]  %s2, 256, %s151, [#allocation4], 64, 64, 4
        $region20: #{tpu_custom_call.1} parent=11 // pred_fallthru
          _
        // Predicated region
        $region21: #{tpu_custom_call.1} parent=11 // pred_check
          %p157 = pneg %p100
        $region22: #{tpu_custom_call.1} parent=11 // pred_check_branch
          %159 = sbr.rel (%p157) target = $region24
        $region23: #{tpu_custom_call.1} parent=11 // pred_region
          _
        $region24: #{tpu_custom_call.1} parent=11 // pred_fallthru
          _
      $region12: #{tpu_custom_call.1} parent=5 // pred_fallthru
        _
      %p160 = scmp.lt.s32.totalorder %s11, 2
      // Predicated region
      $region25: #{tpu_custom_call.1} parent=5 // pred_check
        %p161 = pneg %p160
      $region26: #{tpu_custom_call.1} parent=5 // pred_check_branch
        %163 = sbr.rel (%p161) target = $region28
      $region27: #{tpu_custom_call.1} parent=5 // pred_region
        // Predicated region
        $region29: #{tpu_custom_call.1} parent=27 // pred_check
          %p164 = pneg %p31
        $region30: #{tpu_custom_call.1} parent=27 // pred_check_branch
          %166 = sbr.rel (%p164) target = $region32
        $region31: #{tpu_custom_call.1} parent=27 // pred_region
          %p167 = scmp.lt.s32.totalorder %s11, 1
          %s168 = scalar_select %p167, %s11, 1
          %s169 = smul.addr %s168, 4
          %s170 = smul.addr %s169, 8
          %s171 = scalar_lea.vmem %s0, %s170
        $region32: #{tpu_custom_call.1} parent=27 // pred_fallthru
          _
      $region28: #{tpu_custom_call.1} parent=5 // pred_fallthru
        _
      %p172 = scmp.le.s32.totalorder 1, %s11
      %p173 = scmp.lt.s32.totalorder %s11, 3
      %p174 = pnand %p172, %p173
      %p175 = pneg %p174
      // Predicated region
      $region33: #{tpu_custom_call.1} parent=5 // pred_check
        _
      $region34: #{tpu_custom_call.1} parent=5 // pred_check_branch
        %177 = sbr.rel (%p174) target = $region36
      $region35: #{tpu_custom_call.1} parent=5 // pred_region
        %s178 = ssub.s32 %s11, 1
        // Predicated region
        $region37: #{tpu_custom_call.1} parent=35 // pred_check
          %p179 = pneg %p79
        $region38: #{tpu_custom_call.1} parent=35 // pred_check_branch
          %181 = sbr.rel (%p179) target = $region40
        $region39: #{tpu_custom_call.1} parent=35 // pred_region
          %182 = dma.done [#allocation4], 256
        $region40: #{tpu_custom_call.1} parent=35 // pred_fallthru
          _
        %p183 = scmp.lt.s32.totalorder %s16, 1
        %s184 = scalar_select %p183, %s16, 1
        %s185 = smul.addr %s184, 4
        %s186 = smul.addr %s185, 8
        %s187 = scalar_lea.vmem %s0, %s186
        %p188 = pneg %p37
        %p189 = pneg %p34
        %p190 = pneg %p58
        %p191 = pneg %p55
        %p192 = pneg %p79
        %p193 = pneg %p76
        %p194 = pneg %p100
        %p195 = pneg %p97
        %p196 = pneg %p126
        %p197 = pneg %p123
        %p198 = scmp.lt.s32.totalorder %s16, 1
        %s199 = scalar_select %p198, %s16, 1
        %s200 = smul.addr %s199, 4
        %s201 = smul.addr %s200, 8
        %s202 = scalar_lea.vmem %s4, %s201
        %p203 = scmp.lt.s32.totalorder %s16, 1
        %s204 = scalar_select %p203, %s16, 1
        %s205 = smul.addr %s204, 4
        %s206 = smul.addr %s205, 8
        %s207 = scalar_lea.vmem %s0, %s206
        %p208 = scmp.lt.s32.totalorder %s16, 1
        %s209 = scalar_select %p208, %s16, 1
        %s210 = smul.addr %s209, 4
        %s211 = smul.addr %s210, 8
        %s212 = scalar_lea.vmem %s4, %s211
        %214 = vst [vmem:[#allocation2] sm:$0xf] 0
        %215 = vst [vmem:[#allocation2 + $0x4] sm:$0xf] 0
        %216 = vst [vmem:[#allocation2 + $0x8] sm:$0xf] 0
        %217 = vst [vmem:[#allocation2 + $0xc] sm:$0xf] 0
        %v218 = vld [vmem:[%s207] sm:$0xff]
        %v219 = vld [vmem:[%s207 + $0x8] sm:$0xff]
        %v220 = vld [vmem:[%s207 + $0x10] sm:$0xff]
        %v221 = vld [vmem:[%s207 + $0x18] sm:$0xff]
        %v222 = vpack.c.bf16 %v219, %v218
        %v223 = vpack.c.bf16 %v221, %v220
        %v226 = vunpack.c.l.b16 %v222
        %v227 = vunpack.c.h.b16 %v222
        %v228 = vunpack.c.l.b16 %v223
        %v229 = vunpack.c.h.b16 %v223
        %v230 = vpack.c.b16 %v226, %v226
        %v231 = vpack.c.b16 %v227, %v227
        %v232 = vpack.c.b16 %v228, %v228
        %v233 = vpack.c.b16 %v229, %v229
        %vm238 = vcmask 125952
        %239 = vst.msk [vmem:[#allocation2] sm:$0xf] %vm238, %v230
        %240 = vst.msk [vmem:[#allocation2 + $0x4] sm:$0xf] %vm238, %v231
        %241 = vst.msk [vmem:[#allocation2 + $0x8] sm:$0xf] %vm238, %v232
        %242 = vst.msk [vmem:[#allocation2 + $0xc] sm:$0xf] %vm238, %v233
        %v243 = vld [vmem:[#allocation2] sm:$0xf]
        %v244 = vld [vmem:[#allocation2 + $0x4] sm:$0xf]
        %v245 = vld [vmem:[#allocation2 + $0x8] sm:$0xf]
        %v246 = vld [vmem:[#allocation2 + $0xc] sm:$0xf]
        %v247 = vld [vmem:[%s1] sm:$0xf]
        %v248 = vld [vmem:[%s1 + $0x4] sm:$0xf]
        %v249 = vld [vmem:[%s1 + $0x8] sm:$0xf]
        %v250 = vld [vmem:[%s1 + $0xc] sm:$0xf]
        %v251 = vld [vmem:[%s1 + $0x10] sm:$0xf]
        %v252 = vld [vmem:[%s1 + $0x14] sm:$0xf]
        %v253 = vld [vmem:[%s1 + $0x18] sm:$0xf]
        %v254 = vld [vmem:[%s1 + $0x1c] sm:$0xf]
        %v255 = vld [vmem:[%s1 + $0x20] sm:$0xf]
        %v256 = vld [vmem:[%s1 + $0x24] sm:$0xf]
        %v257 = vld [vmem:[%s1 + $0x28] sm:$0xf]
        %v258 = vld [vmem:[%s1 + $0x2c] sm:$0xf]
        %v259 = vld [vmem:[%s1 + $0x30] sm:$0xf]
        %v260 = vld [vmem:[%s1 + $0x34] sm:$0xf]
        %v261 = vld [vmem:[%s1 + $0x38] sm:$0xf]
        %v262 = vld [vmem:[%s1 + $0x3c] sm:$0xf]
        %v267 = vunpack.c.l.b16 %v243
        %v268 = vunpack.c.l.b16 %v244
        %v269 = vunpack.c.l.b16 %v245
        %v270 = vunpack.c.l.b16 %v246
        %v271 = vpack.c.b16 %v268, %v267
        %v272 = vpack.c.b16 %v270, %v269
        %v291 = vunpack.c.l.b16 %v247
        %v292 = vunpack.c.l.b16 %v248
        %v293 = vunpack.c.l.b16 %v249
        %v294 = vunpack.c.l.b16 %v250
        %v295 = vunpack.c.l.b16 %v251
        %v296 = vunpack.c.l.b16 %v252
        %v297 = vunpack.c.l.b16 %v253
        %v298 = vunpack.c.l.b16 %v254
        %v299 = vunpack.c.l.b16 %v255
        %v300 = vunpack.c.l.b16 %v256
        %v301 = vunpack.c.l.b16 %v257
        %v302 = vunpack.c.l.b16 %v258
        %v303 = vunpack.c.l.b16 %v259
        %v304 = vunpack.c.l.b16 %v260
        %v305 = vunpack.c.l.b16 %v261
        %v306 = vunpack.c.l.b16 %v262
        %v307 = vpack.c.b16 %v292, %v291
        %v308 = vpack.c.b16 %v294, %v293
        %v309 = vpack.c.b16 %v296, %v295
        %v310 = vpack.c.b16 %v298, %v297
        %v311 = vpack.c.b16 %v300, %v299
        %v312 = vpack.c.b16 %v302, %v301
        %v313 = vpack.c.b16 %v304, %v303
        %v314 = vpack.c.b16 %v306, %v305
        %323 = vmatprep.subr.bf16.mxu0 0
        %324 = vmatpush1.bf16.msra.mxu0 %v314
        %325 = vmatprep.subr.bf16.mxu0 0
        %326 = vmatpush1.bf16.msra.mxu0 %v313
        %327 = vmatprep.subr.bf16.mxu0 0
        %328 = vmatpush1.bf16.msra.mxu0 %v312
        %329 = vmatprep.subr.bf16.mxu0 0
        %330 = vmatpush1.bf16.msra.mxu0 %v311
        %331 = vmatprep.subr.bf16.mxu0 0
        %332 = vmatpush1.bf16.msra.mxu0 %v310
        %333 = vmatprep.subr.bf16.mxu0 0
        %334 = vmatpush1.bf16.msra.mxu0 %v309
        %335 = vmatprep.subr.bf16.mxu0 0
        %336 = vmatpush1.bf16.msra.mxu0 %v308
        %337 = vmatprep.subr.bf16.mxu0 0
        %338 = vmatpush1.bf16.msra.mxu0 %v307
        %339 = vmatprep.subr.bf16.mxu0 0
        %340 = vmatpush2.bf16.msra.mxu0 0
        %341 = vmatprep.subr.bf16.mxu0 0
        %342 = vmatpush2.bf16.msra.mxu0 0
        %343 = vmatprep.subr.bf16.mxu0 0
        %344 = vmatpush2.bf16.msra.mxu0 0
        %345 = vmatprep.subr.bf16.mxu0 0
        %346 = vmatpush2.bf16.msra.mxu0 0
        %347 = vmatprep.subr.bf16.mxu0 0
        %348 = vmatpush2.bf16.msra.mxu0 0
        %349 = vmatprep.subr.bf16.mxu0 0
        %350 = vmatpush2.bf16.msra.mxu0 0
        %351 = vmatprep.subr.bf16.mxu0 0
        %352 = vmatpush2.bf16.msra.mxu0 0
        %353 = vmatprep.subr.bf16.mxu0 0
        %354 = vmatpush2.bf16.msra.mxu0 0
        %355 = vmatprep.mubr.bf16.mxu0 0
        %356 = vmatmul.mubr.bf16.gmra.mxu0 %v271
        %v357 = vpop.f32.mrf.mxu0
        %v358 = vadd.f32 0.0, %v357
        %v359 = vpop.f32.mrf.mxu0
        %v360 = vpop.f32.mrf.mxu0
        %v361 = vadd.f32 0.0, %v360
        %v362 = vpop.f32.mrf.mxu0
        %363 = vmatprep.mubr.bf16.mxu0 0
        %364 = vmatmul.mubr.bf16.gmra.mxu0 %v272
        %v365 = vpop.f32.mrf.mxu0
        %v366 = vadd.f32 0.0, %v365
        %v367 = vpop.f32.mrf.mxu0
        %v368 = vpop.f32.mrf.mxu0
        %v369 = vadd.f32 0.0, %v368
        %v370 = vpop.f32.mrf.mxu0
        %371 = vdwg.mxu0
        %v372 = vmul.f32 %v358, 0.2
        %v373 = vmul.f32 %v361, 0.2
        %v374 = vmul.f32 %v366, 0.2
        %v375 = vmul.f32 %v369, 0.2
        %v376 = vmax.f32 %v358, %v372
        %v377 = vmax.f32 %v361, %v373
        %v378 = vmax.f32 %v366, %v374
        %v379 = vmax.f32 %v369, %v375
        %v380 = vpack.c.bf16 %v377, %v376
        %v381 = vpack.c.bf16 %v379, %v378
        %v382 = vld [vmem:[#allocation3] sm:$0xf]
        %v383 = vld [vmem:[#allocation3 + $0x4] sm:$0xf]
        %v384 = vld [vmem:[#allocation3 + $0x8] sm:$0xf]
        %v385 = vld [vmem:[#allocation3 + $0xc] sm:$0xf]
        %v390 = vunpack.c.l.b16 %v382
        %v391 = vunpack.c.l.b16 %v383
        %v392 = vunpack.c.l.b16 %v384
        %v393 = vunpack.c.l.b16 %v385
        %v394 = vpack.c.b16 %v391, %v390
        %v395 = vpack.c.b16 %v393, %v392
        %vm396 = vcmask 261120
        %v398 = vsel %vm396, %v394, 0
        %v401 = vsel %vm396, %v395, 0
        %403 = vmatprep.subr.bf16.mxu0 0
        %404 = vmatpush1.bf16.msra.mxu0 0
        %405 = vmatprep.subr.bf16.mxu0 0
        %406 = vmatpush1.bf16.msra.mxu0 0
        %407 = vmatprep.subr.bf16.mxu0 0
        %408 = vmatpush1.bf16.msra.mxu0 0
        %409 = vmatprep.subr.bf16.mxu0 0
        %410 = vmatpush1.bf16.msra.mxu0 0
        %411 = vmatprep.subr.bf16.mxu0 0
        %412 = vmatpush1.bf16.msra.mxu0 0
        %413 = vmatprep.subr.bf16.mxu0 0
        %414 = vmatpush1.bf16.msra.mxu0 0
        %415 = vmatprep.subr.bf16.mxu0 0
        %416 = vmatpush1.bf16.msra.mxu0 %v381
        %417 = vmatprep.subr.bf16.mxu0 0
        %418 = vmatpush1.bf16.msra.mxu0 %v380
        %419 = vmatprep.subr.bf16.mxu0 0
        %420 = vmatpush2.bf16.msra.mxu0 0
        %421 = vmatprep.subr.bf16.mxu0 0
        %422 = vmatpush2.bf16.msra.mxu0 0
        %423 = vmatprep.subr.bf16.mxu0 0
        %424 = vmatpush2.bf16.msra.mxu0 0
        %425 = vmatprep.subr.bf16.mxu0 0
        %426 = vmatpush2.bf16.msra.mxu0 0
        %427 = vmatprep.subr.bf16.mxu0 0
        %428 = vmatpush2.bf16.msra.mxu0 0
        %429 = vmatprep.subr.bf16.mxu0 0
        %430 = vmatpush2.bf16.msra.mxu0 0
        %431 = vmatprep.subr.bf16.mxu0 0
        %432 = vmatpush2.bf16.msra.mxu0 0
        %433 = vmatprep.subr.bf16.mxu0 0
        %434 = vmatpush2.bf16.msra.mxu0 0
        %435 = vmatprep.mubr.bf16.mxu0 0
        %436 = vmatmul.mubr.bf16.gmra.mxu0 %v398
        %v437 = vpop.f32.mrf.mxu0
        %v438 = vadd.f32 0.0, %v437
        %v439 = vpop.f32.mrf.mxu0
        %v440 = vpop.f32.mrf.mxu0
        %v441 = vadd.f32 0.0, %v440
        %v442 = vpop.f32.mrf.mxu0
        %443 = vmatprep.mubr.bf16.mxu0 0
        %444 = vmatmul.mubr.bf16.gmra.mxu0 %v401
        %v445 = vpop.f32.mrf.mxu0
        %v446 = vadd.f32 0.0, %v445
        %v447 = vpop.f32.mrf.mxu0
        %v448 = vpop.f32.mrf.mxu0
        %v449 = vadd.f32 0.0, %v448
        %v450 = vpop.f32.mrf.mxu0
        %451 = vdwg.mxu0
        %v452 = vld [vmem:[%s3] sm:$0xff]
        %v453 = vld [vmem:[%s3 + $0x8] sm:$0xff]
        %v454 = vld [vmem:[%s3 + $0x10] sm:$0xff]
        %v455 = vld [vmem:[%s3 + $0x18] sm:$0xff]
        %v456 = vadd.f32 %v438, %v452
        %v457 = vadd.f32 %v441, %v453
        %v458 = vadd.f32 %v446, %v454
        %v459 = vadd.f32 %v449, %v455
        %v460 = vmul.f32 %v456, 0.2
        %v461 = vmul.f32 %v457, 0.2
        %v462 = vmul.f32 %v458, 0.2
        %v463 = vmul.f32 %v459, 0.2
        %v464 = vmax.f32 %v456, %v460
        %v465 = vmax.f32 %v457, %v461
        %v466 = vmax.f32 %v458, %v462
        %v467 = vmax.f32 %v459, %v463
        %vm468 = vcmask 130048
        %469 = vst.msk [vmem:[%s212] sm:$0xff] %vm468, %v464
        %470 = vst.msk [vmem:[%s212 + $0x8] sm:$0xff] %vm468, %v465
        %471 = vst.msk [vmem:[%s212 + $0x10] sm:$0xff] %vm468, %v466
        %472 = vst.msk [vmem:[%s212 + $0x18] sm:$0xff] %vm468, %v467
        %p473 = scmp.lt.s32.totalorder %s16, 1
        %s474 = scalar_select %p473, %s16, 1
        %s475 = smul.addr %s474, 4
        %s476 = smul.addr %s475, 8
        %s477 = scalar_lea.vmem %s4, %s476
        // Predicated region
        $region41: #{tpu_custom_call.1} parent=35 // pred_check
          %p478 = pneg %p123
        $region42: #{tpu_custom_call.1} parent=35 // pred_check_branch
          %480 = sbr.rel (%p478) target = $region44
        $region43: #{tpu_custom_call.1} parent=35 // pred_region
          _
        $region44: #{tpu_custom_call.1} parent=35 // pred_fallthru
          _
      $region36: #{tpu_custom_call.1} parent=5 // pred_fallthru
        _
      %p481 = scmp.le.s32.totalorder 2, %s11
      // Predicated region
      $region45: #{tpu_custom_call.1} parent=5 // pred_check
        %p482 = pneg %p481
      $region46: #{tpu_custom_call.1} parent=5 // pred_check_branch
        %484 = sbr.rel (%p482) target = $region48
      $region47: #{tpu_custom_call.1} parent=5 // pred_region
        %s485 = ssub.s32 %s11, 2
        // Predicated region
        $region49: #{tpu_custom_call.1} parent=47 // pred_check
          %p486 = pneg %p129
        $region50: #{tpu_custom_call.1} parent=47 // pred_check_branch
          %488 = sbr.rel (%p486) target = $region52
        $region51: #{tpu_custom_call.1} parent=47 // pred_region
          %p489 = scmp.lt.s32.totalorder %s17, 1
          %s490 = scalar_select %p489, %s17, 1
          %s491 = smul.addr %s490, 4
          %s492 = smul.addr %s491, 8
          %s493 = scalar_lea.vmem %s4, %s492
        $region52: #{tpu_custom_call.1} parent=47 // pred_fallthru
          _
      $region48: #{tpu_custom_call.1} parent=5 // pred_fallthru
        _
    $region6: #{tpu_custom_call.1} parent=1 // loop_footer
      %s15 = sadd.s32 1, %s11
    $region7: #{tpu_custom_call.1} parent=1 // loop_footer_branch
      %10 = sbr.rel target = $region3
    $region8: #{tpu_custom_call.1} parent=1 // loop_exit
      _
    %494 = vsyncpa [#allocation4], 1
    %s495 = scalar_lea.sflag [#allocation4], 1
    %496 = vsyncpa %s495, 1

</llo_original>
